<compile_context>
chip_gen: v5e
topology: v5e:2x2
jax: 0.10.0
libtpu: 0.0.40
codegen_flags: <defaults>
</compile_context>

<pallas_src>
import math
from functools import partial

import jax
import jax.numpy as jnp
import numpy as np
from jax import lax
from jax.experimental import pallas as pl


def _make_attention_kernel(batch: int, seq: int, dim: int, n_heads: int):
    H = n_heads
    hd = dim // n_heads
    N = batch * seq
    scale = 1.0 / math.sqrt(hd)

    def kernel(x_ref, mask_ref, wq_ref, wk_ref, wv_ref, wo_ref, bo_ref, o_ref):
        # x_ref:    (N, D)        tokens (batch folded into the row axis)
        # mask_ref: (N, N)        block-diagonal additive mask (0 / -1e30)
        # wq/wk/wv: (H, hd, D)    per-head projection weights ((out,in) layout)
        # wo_ref:   (H, D, hd)    per-head output-projection weights
        # bo_ref:   (1, D)        output bias
        # o_ref:    (N, D)        result

        # bf16 operands, f32 accumulation on the MXU.
        x = x_ref[...].astype(jnp.bfloat16)                       # (N, D)
        # Replicate tokens across the head axis once; every matmul below is then
        # a single head-batched dot_general (no per-head slicing / concat).
        xh = jnp.broadcast_to(x[None, :, :], (H, N, dim))         # (H, N, D)

        dn_proj = (((2,), (2,)), ((0,), (0,)))                    # contract D, batch H
        q = lax.dot_general(xh, wq_ref[...].astype(jnp.bfloat16), dn_proj,
                            preferred_element_type=jnp.float32)   # (H, N, hd)
        k = lax.dot_general(xh, wk_ref[...].astype(jnp.bfloat16), dn_proj,
                            preferred_element_type=jnp.float32)   # (H, N, hd)
        v = lax.dot_general(xh, wv_ref[...].astype(jnp.bfloat16), dn_proj,
                            preferred_element_type=jnp.float32)   # (H, N, hd)
        q = q * scale                                             # 1/sqrt(hd) applied once

        # Scores for all (batch, head) pairs at once; the block-diagonal mask
        # keeps attention inside each batch element.
        dn_qk = (((2,), (2,)), ((0,), (0,)))                      # contract hd, batch H
        s = lax.dot_general(q.astype(jnp.bfloat16), k.astype(jnp.bfloat16),
                            dn_qk, preferred_element_type=jnp.float32)  # (H, N, N)
        s = s + mask_ref[...][None, :, :]

        # Numerically stable softmax with deferred normalisation.
        m = jnp.max(s, axis=-1, keepdims=True)                    # (H, N, 1)
        p = jnp.exp(s - m)                                        # masked entries -> 0
        denom = jnp.sum(p, axis=-1, keepdims=True)                # (H, N, 1)

        dn_pv = (((2,), (1,)), ((0,), (0,)))                      # contract keys, batch H
        o = lax.dot_general(p.astype(jnp.bfloat16), v.astype(jnp.bfloat16),
                            dn_pv, preferred_element_type=jnp.float32)  # (H, N, hd)
        o = o * pl.reciprocal(denom, approx=True)                 # EUP reciprocal (free slot)

        # Output projection: summing the per-head contributions is equivalent to
        # concat-over-heads followed by a (N, D) @ (D, D) matmul.
        dn_out = (((2,), (2,)), ((0,), (0,)))                     # contract hd, batch H
        y = lax.dot_general(o.astype(jnp.bfloat16),
                            wo_ref[...].astype(jnp.bfloat16),
                            dn_out, preferred_element_type=jnp.float32)  # (H, N, D)
        y = jnp.sum(y, axis=0) + bo_ref[...]                      # (N, D) + bias
        o_ref[...] = y.astype(o_ref.dtype)                        # dropout (rate 0) = identity

    return kernel


@partial(jax.jit, static_argnums=(6,))
def attention_pallas(x, wq, wk, wv, wo, bo, n_heads):
    """x: (B, S, D) float32; wq/wk/wv/wo: (D, D) PyTorch (out, in) layout; bo: (D,)."""
    B, S, D = x.shape
    H = n_heads
    hd = D // H
    N = B * S

    # Glue / weight-layout prep (pure reshapes of the (out, in) weights; only the
    # output weight needs one tiny (D,H,hd)->(H,D,hd) transpose.  In a real model
    # this would be done once at weight-load time, not per forward call).
    x2 = x.reshape(N, D)
    wq3 = wq.reshape(H, hd, D)
    wk3 = wk.reshape(H, hd, D)
    wv3 = wv.reshape(H, hd, D)
    wo3 = wo.reshape(D, H, hd).transpose(1, 0, 2)
    bo2 = bo.reshape(1, D)

    # Block-diagonal additive mask (static, becomes a compile-time constant).
    token_batch = np.arange(N) // S
    mask = jnp.asarray(
        np.where(token_batch[:, None] == token_batch[None, :], 0.0, -1e30)
        .astype(np.float32))

    flops = (3 * 2 * N * D * D            # q/k/v projections
             + 2 * 2 * H * N * N * hd     # scores + p @ v
             + 2 * H * N * hd * D)        # output projection
    transcendentals = H * N * N + H * N   # exp + reciprocal
    bytes_accessed = 4 * (2 * N * D + 4 * D * D + D + N * N)

    kernel = _make_attention_kernel(B, S, D, H)
    out2 = pl.pallas_call(
        kernel,
        out_shape=jax.ShapeDtypeStruct((N, D), x.dtype),
        cost_estimate=pl.CostEstimate(
            flops=flops,
            transcendentals=transcendentals,
            bytes_accessed=bytes_accessed),
    )(x2, mask, wq3, wk3, wv3, wo3, bo2)
    return out2.reshape(B, S, D)


def attention_reference(x, wq, wk, wv, wo, bo, n_heads):
    """Pure-JAX replica of the PyTorch forward (attn_mode='qk', dp_rate=0)."""
    B, S, D = x.shape
    hd = D // n_heads
    q = (x @ wq.T).reshape(B, S, n_heads, hd).transpose(0, 2, 1, 3)
    k = (x @ wk.T).reshape(B, S, n_heads, hd).transpose(0, 2, 1, 3)
    v = (x @ wv.T).reshape(B, S, n_heads, hd).transpose(0, 2, 1, 3)
    attn = jnp.einsum("bhqd,bhkd->bhqk", q, k) / np.sqrt(hd)
    attn = jax.nn.softmax(attn, axis=-1)
    out = jnp.einsum("bhqk,bhkd->bhqd", attn, v)
    out = out.transpose(0, 2, 1, 3).reshape(B, S, D)
    return out @ wo.T + bo


if __name__ == "__main__":
    # Small shapes consistent with the module: dim=32, n_heads=4, seq=8, batch=2.
    B, S, D, H = 2, 8, 32, 4

    key = jax.random.PRNGKey(0)
    kx, kq, kk, kv, ko, kb = jax.random.split(key, 6)

    x = jax.random.normal(kx, (B, S, D), dtype=jnp.float32)
    # PyTorch nn.Linear weight layout: (out_features, in_features).
    bound = 1.0 / math.sqrt(D)
    wq = jax.random.uniform(kq, (D, D), jnp.float32, -bound, bound)
    wk = jax.random.uniform(kk, (D, D), jnp.float32, -bound, bound)
    wv = jax.random.uniform(kv, (D, D), jnp.float32, -bound, bound)
    wo = jax.random.uniform(ko, (D, D), jnp.float32, -bound, bound)
    bo = jax.random.uniform(kb, (D,), jnp.float32, -bound, bound)

    out = attention_pallas(x, wq, wk, wv, wo, bo, H)
    out = jax.block_until_ready(out)

    ref = attention_reference(x, wq, wk, wv, wo, bo, H)
    # Tolerance loosened vs the pure-f32 version because the kernel feeds the
    # MXU bf16 operands (f32 accumulation) and uses the approximate reciprocal.
    np.testing.assert_allclose(np.asarray(out), np.asarray(ref),
                               rtol=3e-2, atol=3e-2)

    # TODO(synk): attn_mode='pos'/'gate' branches, the FMoE expert path and
    # non-zero dropout are not exercised by the default 'qk'/attention_moe=False
    # configuration and are not implemented here.
    print("KERNEL_OK")
</pallas_src>

<mosaic_0001>
module attributes {stable_mosaic.version = 11 : i64} {
  func.func @kernel(%arg0: memref<16x32xf32, #tpu.memory_space<vmem>>, %arg1: memref<16x16xf32, #tpu.memory_space<vmem>>, %arg2: memref<4x8x32xf32, #tpu.memory_space<vmem>>, %arg3: memref<4x8x32xf32, #tpu.memory_space<vmem>>, %arg4: memref<4x8x32xf32, #tpu.memory_space<vmem>>, %arg5: memref<4x32x8xf32, #tpu.memory_space<vmem>>, %arg6: memref<1x32xf32, #tpu.memory_space<vmem>>, %arg7: memref<16x32xf32, #tpu.memory_space<vmem>>) attributes {dimension_semantics = [], scalar_prefetch = 0 : i64, scratch_operands = 0 : i64, tpu.core_type = #tpu.core_type<tc>} {
    %c0 = arith.constant 0 : index
    %c0_0 = arith.constant 0 : index
    %0 = vector.load %arg0[%c0, %c0_0] : memref<16x32xf32, #tpu.memory_space<vmem>>, vector<16x32xf32>
    %1 = arith.truncf %0 : vector<16x32xf32> to vector<16x32xbf16>
    %2 = vector.shape_cast %1 : vector<16x32xbf16> to vector<1x16x32xbf16>
    %3 = vector.shape_cast %2 : vector<1x16x32xbf16> to vector<1x16x32xbf16>
    %4 = vector.broadcast %3 : vector<1x16x32xbf16> to vector<4x16x32xbf16>
    %c0_1 = arith.constant 0 : index
    %c0_2 = arith.constant 0 : index
    %c0_3 = arith.constant 0 : index
    %5 = vector.load %arg2[%c0_1, %c0_2, %c0_3] : memref<4x8x32xf32, #tpu.memory_space<vmem>>, vector<4x8x32xf32>
    %6 = arith.truncf %5 : vector<4x8x32xf32> to vector<4x8x32xbf16>
    %cst = arith.constant dense<0.000000e+00> : vector<4x16x8xf32>
    %7 = tpu.matmul %4, %6, %cst {dimension_numbers = #tpu.dot_dimension_numbers<[2], [2], [1], [1], [0, 0, 0, 1, 1, 1], [0], [0]>} : vector<4x16x32xbf16>, vector<4x8x32xbf16>, vector<4x16x8xf32> -> vector<4x16x8xf32>
    %c0_4 = arith.constant 0 : index
    %c0_5 = arith.constant 0 : index
    %c0_6 = arith.constant 0 : index
    %8 = vector.load %arg3[%c0_4, %c0_5, %c0_6] : memref<4x8x32xf32, #tpu.memory_space<vmem>>, vector<4x8x32xf32>
    %9 = arith.truncf %8 : vector<4x8x32xf32> to vector<4x8x32xbf16>
    %cst_7 = arith.constant dense<0.000000e+00> : vector<4x16x8xf32>
    %10 = tpu.matmul %4, %9, %cst_7 {dimension_numbers = #tpu.dot_dimension_numbers<[2], [2], [1], [1], [0, 0, 0, 1, 1, 1], [0], [0]>} : vector<4x16x32xbf16>, vector<4x8x32xbf16>, vector<4x16x8xf32> -> vector<4x16x8xf32>
    %c0_8 = arith.constant 0 : index
    %c0_9 = arith.constant 0 : index
    %c0_10 = arith.constant 0 : index
    %11 = vector.load %arg4[%c0_8, %c0_9, %c0_10] : memref<4x8x32xf32, #tpu.memory_space<vmem>>, vector<4x8x32xf32>
    %12 = arith.truncf %11 : vector<4x8x32xf32> to vector<4x8x32xbf16>
    %cst_11 = arith.constant dense<0.000000e+00> : vector<4x16x8xf32>
    %13 = tpu.matmul %4, %12, %cst_11 {dimension_numbers = #tpu.dot_dimension_numbers<[2], [2], [1], [1], [0, 0, 0, 1, 1, 1], [0], [0]>} : vector<4x16x32xbf16>, vector<4x8x32xbf16>, vector<4x16x8xf32> -> vector<4x16x8xf32>
    %cst_12 = arith.constant 0.353553385 : f32
    %14 = vector.broadcast %cst_12 : f32 to vector<4x16x8xf32>
    %15 = arith.mulf %7, %14 : vector<4x16x8xf32>
    %16 = arith.truncf %15 : vector<4x16x8xf32> to vector<4x16x8xbf16>
    %17 = arith.truncf %10 : vector<4x16x8xf32> to vector<4x16x8xbf16>
    %cst_13 = arith.constant dense<0.000000e+00> : vector<4x16x16xf32>
    %18 = tpu.matmul %16, %17, %cst_13 {dimension_numbers = #tpu.dot_dimension_numbers<[2], [2], [1], [1], [0, 0, 0, 1, 1, 1], [0], [0]>} : vector<4x16x8xbf16>, vector<4x16x8xbf16>, vector<4x16x16xf32> -> vector<4x16x16xf32>
    %c0_14 = arith.constant 0 : index
    %c0_15 = arith.constant 0 : index
    %19 = vector.load %arg1[%c0_14, %c0_15] : memref<16x16xf32, #tpu.memory_space<vmem>>, vector<16x16xf32>
    %20 = vector.shape_cast %19 : vector<16x16xf32> to vector<1x16x16xf32>
    %21 = vector.broadcast %20 : vector<1x16x16xf32> to vector<4x16x16xf32>
    %22 = arith.addf %18, %21 : vector<4x16x16xf32>
    %cst_16 = arith.constant dense<0xFF800000> : vector<4x16xf32>
    %23 = vector.multi_reduction <maximumf>, %22, %cst_16 [2] : vector<4x16x16xf32> to vector<4x16xf32>
    %24 = vector.shape_cast %23 : vector<4x16xf32> to vector<4x16x1xf32>
    %25 = vector.broadcast %24 : vector<4x16x1xf32> to vector<4x16x16xf32>
    %26 = arith.subf %22, %25 : vector<4x16x16xf32>
    %27 = math.exp %26 : vector<4x16x16xf32>
    %cst_17 = arith.constant dense<0.000000e+00> : vector<4x16xf32>
    %28 = vector.multi_reduction <add>, %27, %cst_17 [2] : vector<4x16x16xf32> to vector<4x16xf32>
    %29 = vector.shape_cast %28 : vector<4x16xf32> to vector<4x16x1xf32>
    %30 = arith.truncf %27 : vector<4x16x16xf32> to vector<4x16x16xbf16>
    %31 = arith.truncf %13 : vector<4x16x8xf32> to vector<4x16x8xbf16>
    %cst_18 = arith.constant dense<0.000000e+00> : vector<4x16x8xf32>
    %32 = tpu.matmul %30, %31, %cst_18 {dimension_numbers = #tpu.dot_dimension_numbers<[2], [1], [1], [2], [0, 0, 0, 1, 1, 2], [0], [0]>} : vector<4x16x16xbf16>, vector<4x16x8xbf16>, vector<4x16x8xf32> -> vector<4x16x8xf32>
    %33 = tpu.reciprocal %29 {approx = true} : vector<4x16x1xf32> -> vector<4x16x1xf32>
    %34 = vector.broadcast %33 : vector<4x16x1xf32> to vector<4x16x8xf32>
    %35 = arith.mulf %32, %34 : vector<4x16x8xf32>
    %36 = arith.truncf %35 : vector<4x16x8xf32> to vector<4x16x8xbf16>
    %c0_19 = arith.constant 0 : index
    %c0_20 = arith.constant 0 : index
    %c0_21 = arith.constant 0 : index
    %37 = vector.load %arg5[%c0_19, %c0_20, %c0_21] : memref<4x32x8xf32, #tpu.memory_space<vmem>>, vector<4x32x8xf32>
    %38 = arith.truncf %37 : vector<4x32x8xf32> to vector<4x32x8xbf16>
    %cst_22 = arith.constant dense<0.000000e+00> : vector<4x16x32xf32>
    %39 = tpu.matmul %36, %38, %cst_22 {dimension_numbers = #tpu.dot_dimension_numbers<[2], [2], [1], [1], [0, 0, 0, 1, 1, 1], [0], [0]>} : vector<4x16x8xbf16>, vector<4x32x8xbf16>, vector<4x16x32xf32> -> vector<4x16x32xf32>
    %cst_23 = arith.constant dense<0.000000e+00> : vector<16x32xf32>
    %40 = vector.multi_reduction <add>, %39, %cst_23 [0] : vector<4x16x32xf32> to vector<16x32xf32>
    %c0_24 = arith.constant 0 : index
    %c0_25 = arith.constant 0 : index
    %41 = vector.load %arg6[%c0_24, %c0_25] : memref<1x32xf32, #tpu.memory_space<vmem>>, vector<1x32xf32>
    %42 = vector.broadcast %41 : vector<1x32xf32> to vector<16x32xf32>
    %43 = arith.addf %40, %42 : vector<16x32xf32>
    %c0_26 = arith.constant 0 : index
    %c0_27 = arith.constant 0 : index
    %44 = vector.load %arg7[%c0_26, %c0_27] : memref<16x32xf32, #tpu.memory_space<vmem>>, vector<16x32xf32>
    tpu.vector_store %arg7[%c0_26, %c0_27], %43 {strides = array<i32>} : memref<16x32xf32, #tpu.memory_space<vmem>>, vector<16x32xf32>,
    return
  }
}

</mosaic_0001>

<llo_original>
// kernel: attention_pallas.1
$region0: #{attention_pallas.1}
  #allocation0 [shape = 'u32[]', space=smem, size = 0x4, offset = 0x4, fixed_abs, tag = 'smem constant byte address 0x4 - core index']
  #allocation1 [shape = 'u32[72,128]{1,0:T(1,128)}', space=vmem, size = 0x9000, scoped, tag = 'internal scratch']
  %s0 = inlined_call_operand.vmem [shape: f32[16,32], index: 0, kind: input, shape index: {}]
  %s1 = inlined_call_operand.vmem [shape: f32[16,16], index: 1, kind: input, shape index: {}]
  %s2 = inlined_call_operand.vmem [shape: f32[4,8,32], index: 2, kind: input, shape index: {}]
  %s3 = inlined_call_operand.vmem [shape: f32[4,8,32], index: 3, kind: input, shape index: {}]
  %s4 = inlined_call_operand.vmem [shape: f32[4,8,32], index: 4, kind: input, shape index: {}]
  %s5 = inlined_call_operand.vmem [shape: f32[4,32,8], index: 5, kind: input, shape index: {}]
  %s6 = inlined_call_operand.vmem [shape: f32[1,32], index: 6, kind: input, shape index: {}]
  %s7 = inlined_call_operand.hbm [shape: f32[16,32], index: 7, kind: output, shape index: {}]
  %s8 = sld [smem:[#allocation0]]
  $region38: #{attention_pallas.1} parent=0
    _
  %s10 = ssub.s32 1, %s8
  %s11 = scalar_select 0, %s10, %s8
  $region1: #{attention_pallas.1} parent=0
    #allocation2 [shape = 'u8[8192]{0}', space=vmem, size = 0x2000, scoped, tag = 'output window, operand 0, single buffered']
    #allocation3 [shape = 's32[1]{0}', space=sflag, size = 0x4, scoped, tag = 'scoped memory for attention_pallas.1']
    %12 = vsyncpa [#allocation3], 0
    // Predicated region
    $region2: #{attention_pallas.1} parent=1 // pred_check
      _
    $region3: #{attention_pallas.1} parent=1 // pred_check_branch
      %14 = sbr.rel (0) target = $region5
    $region4: #{attention_pallas.1} parent=1 // pred_region
      _
    $region5: #{attention_pallas.1} parent=1 // pred_fallthru
      _
    // Predicated region
    $region6: #{attention_pallas.1} parent=1 // pred_check
      _
    $region7: #{attention_pallas.1} parent=1 // pred_check_branch
      %16 = sbr.rel (0) target = $region9
    $region8: #{attention_pallas.1} parent=1 // pred_region
      _
    $region9: #{attention_pallas.1} parent=1 // pred_fallthru
      _
    // Predicated region
    $region10: #{attention_pallas.1} parent=1 // pred_check
      _
    $region11: #{attention_pallas.1} parent=1 // pred_check_branch
      %18 = sbr.rel (0) target = $region13
    $region12: #{attention_pallas.1} parent=1 // pred_region
      _
    $region13: #{attention_pallas.1} parent=1 // pred_fallthru
      _
    // Predicated region
    $region14: #{attention_pallas.1} parent=1 // pred_check
      _
    $region15: #{attention_pallas.1} parent=1 // pred_check_branch
      %20 = sbr.rel (0) target = $region17
    $region16: #{attention_pallas.1} parent=1 // pred_region
      _
    $region17: #{attention_pallas.1} parent=1 // pred_fallthru
      _
    // Predicated region
    $region18: #{attention_pallas.1} parent=1 // pred_check
      _
    $region19: #{attention_pallas.1} parent=1 // pred_check_branch
      %22 = sbr.rel (0) target = $region21
    $region20: #{attention_pallas.1} parent=1 // pred_region
      _
    $region21: #{attention_pallas.1} parent=1 // pred_fallthru
      _
    // Predicated region
    $region22: #{attention_pallas.1} parent=1 // pred_check
      _
    $region23: #{attention_pallas.1} parent=1 // pred_check_branch
      %24 = sbr.rel (0) target = $region25
    $region24: #{attention_pallas.1} parent=1 // pred_region
      _
    $region25: #{attention_pallas.1} parent=1 // pred_fallthru
      _
    // Predicated region
    $region26: #{attention_pallas.1} parent=1 // pred_check
      _
    $region27: #{attention_pallas.1} parent=1 // pred_check_branch
      %26 = sbr.rel (0) target = $region29
    $region28: #{attention_pallas.1} parent=1 // pred_region
      _
    $region29: #{attention_pallas.1} parent=1 // pred_fallthru
      _
    %v28 = vld [vmem:[%s0] sm:$0xff]
    %v29 = vld [vmem:[%s0 + $0x8] sm:$0xff]
    %v30 = vpack.c.bf16 %v28, %v28
    %v31 = vpack.c.bf16 %v29, %v29
    %v32 = vld [vmem:[%s2] sm:$0xff]
    %v33 = vld [vmem:[%s2 + $0x8] sm:$0xff]
    %v34 = vld [vmem:[%s2 + $0x10] sm:$0xff]
    %v35 = vld [vmem:[%s2 + $0x18] sm:$0xff]
    %v36 = vpack.c.bf16 %v32, %v32
    %v37 = vpack.c.bf16 %v33, %v33
    %v38 = vpack.c.bf16 %v34, %v34
    %v39 = vpack.c.bf16 %v35, %v35
    %v42 = vunpack.c.l.b16 %v30
    %v43 = vunpack.c.l.b16 %v31
    %v44 = vpack.c.b16 %v43, %v42
    %vm45 = vcmask 261120
    %v47 = vsel %vm45, %v44, 0
    %v50 = vsel %vm45, %v36, 0
    %52 = vmatpush.bf16.xpose.msra.mxu0 0
    %53 = vmatpush.bf16.xpose.msra.mxu0 0
    %54 = vmatpush.bf16.xpose.msra.mxu0 0
    %55 = vmatpush.bf16.xpose.msra.mxu0 0
    %56 = vmatpush.bf16.xpose.msra.mxu0 0
    %57 = vmatpush.bf16.xpose.msra.mxu0 0
    %58 = vmatpush.bf16.xpose.msra.mxu0 0
    %59 = vmatpush.bf16.xpose.msra.mxu0 %v50
    %60 = vmatmul.bf16.gmra.mxu0 %v47
    %v61 = vpop.f32.mrf.mxu0
    %v62 = vadd.f32 0.0, %v61
    %v63 = vpop.f32.mrf.mxu0
    %v64 = vadd.f32 0.0, %v63
    %65 = vdwg.mxu0
    %v67 = vsel %vm45, %v37, 0
    %69 = vmatpush.bf16.xpose.msra.mxu0 0
    %70 = vmatpush.bf16.xpose.msra.mxu0 0
    %71 = vmatpush.bf16.xpose.msra.mxu0 0
    %72 = vmatpush.bf16.xpose.msra.mxu0 0
    %73 = vmatpush.bf16.xpose.msra.mxu0 0
    %74 = vmatpush.bf16.xpose.msra.mxu0 0
    %75 = vmatpush.bf16.xpose.msra.mxu0 0
    %76 = vmatpush.bf16.xpose.msra.mxu0 %v67
    %77 = vmatmul.bf16.gmra.mxu0 %v47
    %v78 = vpop.f32.mrf.mxu0
    %v79 = vadd.f32 0.0, %v78
    %v80 = vpop.f32.mrf.mxu0
    %v81 = vadd.f32 0.0, %v80
    %82 = vdwg.mxu0
    %v84 = vsel %vm45, %v38, 0
    %86 = vmatpush.bf16.xpose.msra.mxu0 0
    %87 = vmatpush.bf16.xpose.msra.mxu0 0
    %88 = vmatpush.bf16.xpose.msra.mxu0 0
    %89 = vmatpush.bf16.xpose.msra.mxu0 0
    %90 = vmatpush.bf16.xpose.msra.mxu0 0
    %91 = vmatpush.bf16.xpose.msra.mxu0 0
    %92 = vmatpush.bf16.xpose.msra.mxu0 0
    %93 = vmatpush.bf16.xpose.msra.mxu0 %v84
    %94 = vmatmul.bf16.gmra.mxu0 %v47
    %v95 = vpop.f32.mrf.mxu0
    %v96 = vadd.f32 0.0, %v95
    %v97 = vpop.f32.mrf.mxu0
    %v98 = vadd.f32 0.0, %v97
    %99 = vdwg.mxu0
    %v101 = vsel %vm45, %v39, 0
    %103 = vmatpush.bf16.xpose.msra.mxu0 0
    %104 = vmatpush.bf16.xpose.msra.mxu0 0
    %105 = vmatpush.bf16.xpose.msra.mxu0 0
    %106 = vmatpush.bf16.xpose.msra.mxu0 0
    %107 = vmatpush.bf16.xpose.msra.mxu0 0
    %108 = vmatpush.bf16.xpose.msra.mxu0 0
    %109 = vmatpush.bf16.xpose.msra.mxu0 0
    %110 = vmatpush.bf16.xpose.msra.mxu0 %v101
    %111 = vmatmul.bf16.gmra.mxu0 %v47
    %v112 = vpop.f32.mrf.mxu0
    %v113 = vadd.f32 0.0, %v112
    %v114 = vpop.f32.mrf.mxu0
    %v115 = vadd.f32 0.0, %v114
    %116 = vdwg.mxu0
    %v117 = vld [vmem:[%s3] sm:$0xff]
    %v118 = vld [vmem:[%s3 + $0x8] sm:$0xff]
    %v119 = vld [vmem:[%s3 + $0x10] sm:$0xff]
    %v120 = vld [vmem:[%s3 + $0x18] sm:$0xff]
    %v121 = vpack.c.bf16 %v117, %v117
    %v122 = vpack.c.bf16 %v118, %v118
    %v123 = vpack.c.bf16 %v119, %v119
    %v124 = vpack.c.bf16 %v120, %v120
    %v126 = vsel %vm45, %v121, 0
    %128 = vmatpush.bf16.xpose.msra.mxu0 0
    %129 = vmatpush.bf16.xpose.msra.mxu0 0
    %130 = vmatpush.bf16.xpose.msra.mxu0 0
    %131 = vmatpush.bf16.xpose.msra.mxu0 0
    %132 = vmatpush.bf16.xpose.msra.mxu0 0
    %133 = vmatpush.bf16.xpose.msra.mxu0 0
    %134 = vmatpush.bf16.xpose.msra.mxu0 0
    %135 = vmatpush.bf16.xpose.msra.mxu0 %v126
    %136 = vmatmul.bf16.gmra.mxu0 %v47
    %v137 = vpop.f32.mrf.mxu0
    %v138 = vadd.f32 0.0, %v137
    %v139 = vpop.f32.mrf.mxu0
    %v140 = vadd.f32 0.0, %v139
    %141 = vdwg.mxu0
    %v143 = vsel %vm45, %v122, 0
    %145 = vmatpush.bf16.xpose.msra.mxu0 0
    %146 = vmatpush.bf16.xpose.msra.mxu0 0
    %147 = vmatpush.bf16.xpose.msra.mxu0 0
    %148 = vmatpush.bf16.xpose.msra.mxu0 0
    %149 = vmatpush.bf16.xpose.msra.mxu0 0
    %150 = vmatpush.bf16.xpose.msra.mxu0 0
    %151 = vmatpush.bf16.xpose.msra.mxu0 0
    %152 = vmatpush.bf16.xpose.msra.mxu0 %v143
    %153 = vmatmul.bf16.gmra.mxu0 %v47
    %v154 = vpop.f32.mrf.mxu0
    %v155 = vadd.f32 0.0, %v154
    %v156 = vpop.f32.mrf.mxu0
    %v157 = vadd.f32 0.0, %v156
    %158 = vdwg.mxu0
    %v160 = vsel %vm45, %v123, 0
    %162 = vmatpush.bf16.xpose.msra.mxu0 0
    %163 = vmatpush.bf16.xpose.msra.mxu0 0
    %164 = vmatpush.bf16.xpose.msra.mxu0 0
    %165 = vmatpush.bf16.xpose.msra.mxu0 0
    %166 = vmatpush.bf16.xpose.msra.mxu0 0
    %167 = vmatpush.bf16.xpose.msra.mxu0 0
    %168 = vmatpush.bf16.xpose.msra.mxu0 0
    %169 = vmatpush.bf16.xpose.msra.mxu0 %v160
    %170 = vmatmul.bf16.gmra.mxu0 %v47
    %v171 = vpop.f32.mrf.mxu0
    %v172 = vadd.f32 0.0, %v171
    %v173 = vpop.f32.mrf.mxu0
    %v174 = vadd.f32 0.0, %v173
    %175 = vdwg.mxu0
    %v177 = vsel %vm45, %v124, 0
    %179 = vmatpush.bf16.xpose.msra.mxu0 0
    %180 = vmatpush.bf16.xpose.msra.mxu0 0
    %181 = vmatpush.bf16.xpose.msra.mxu0 0
    %182 = vmatpush.bf16.xpose.msra.mxu0 0
    %183 = vmatpush.bf16.xpose.msra.mxu0 0
    %184 = vmatpush.bf16.xpose.msra.mxu0 0
    %185 = vmatpush.bf16.xpose.msra.mxu0 0
    %186 = vmatpush.bf16.xpose.msra.mxu0 %v177
    %187 = vmatmul.bf16.gmra.mxu0 %v47
    %v188 = vpop.f32.mrf.mxu0
    %v189 = vadd.f32 0.0, %v188
    %v190 = vpop.f32.mrf.mxu0
    %v191 = vadd.f32 0.0, %v190
    %192 = vdwg.mxu0
    %v193 = vld [vmem:[%s4] sm:$0xff]
    %v194 = vld [vmem:[%s4 + $0x8] sm:$0xff]
    %v195 = vld [vmem:[%s4 + $0x10] sm:$0xff]
    %v196 = vld [vmem:[%s4 + $0x18] sm:$0xff]
    %v197 = vpack.c.bf16 %v193, %v193
    %v198 = vpack.c.bf16 %v194, %v194
    %v199 = vpack.c.bf16 %v195, %v195
    %v200 = vpack.c.bf16 %v196, %v196
    %v202 = vsel %vm45, %v197, 0
    %204 = vmatpush.bf16.xpose.msra.mxu0 0
    %205 = vmatpush.bf16.xpose.msra.mxu0 0
    %206 = vmatpush.bf16.xpose.msra.mxu0 0
    %207 = vmatpush.bf16.xpose.msra.mxu0 0
    %208 = vmatpush.bf16.xpose.msra.mxu0 0
    %209 = vmatpush.bf16.xpose.msra.mxu0 0
    %210 = vmatpush.bf16.xpose.msra.mxu0 0
    %211 = vmatpush.bf16.xpose.msra.mxu0 %v202
    %212 = vmatmul.bf16.gmra.mxu0 %v47
    %v213 = vpop.f32.mrf.mxu0
    %v214 = vadd.f32 0.0, %v213
    %v215 = vpop.f32.mrf.mxu0
    %v216 = vadd.f32 0.0, %v215
    %217 = vdwg.mxu0
    %v219 = vsel %vm45, %v198, 0
    %221 = vmatpush.bf16.xpose.msra.mxu0 0
    %222 = vmatpush.bf16.xpose.msra.mxu0 0
    %223 = vmatpush.bf16.xpose.msra.mxu0 0
    %224 = vmatpush.bf16.xpose.msra.mxu0 0
    %225 = vmatpush.bf16.xpose.msra.mxu0 0
    %226 = vmatpush.bf16.xpose.msra.mxu0 0
    %227 = vmatpush.bf16.xpose.msra.mxu0 0
    %228 = vmatpush.bf16.xpose.msra.mxu0 %v219
    %229 = vmatmul.bf16.gmra.mxu0 %v47
    %v230 = vpop.f32.mrf.mxu0
    %v231 = vadd.f32 0.0, %v230
    %v232 = vpop.f32.mrf.mxu0
    %v233 = vadd.f32 0.0, %v232
    %234 = vdwg.mxu0
    %v236 = vsel %vm45, %v199, 0
    %238 = vmatpush.bf16.xpose.msra.mxu0 0
    %239 = vmatpush.bf16.xpose.msra.mxu0 0
    %240 = vmatpush.bf16.xpose.msra.mxu0 0
    %241 = vmatpush.bf16.xpose.msra.mxu0 0
    %242 = vmatpush.bf16.xpose.msra.mxu0 0
    %243 = vmatpush.bf16.xpose.msra.mxu0 0
    %244 = vmatpush.bf16.xpose.msra.mxu0 0
    %245 = vmatpush.bf16.xpose.msra.mxu0 %v236
    %246 = vmatmul.bf16.gmra.mxu0 %v47
    %v247 = vpop.f32.mrf.mxu0
    %v248 = vadd.f32 0.0, %v247
    %v249 = vpop.f32.mrf.mxu0
    %v250 = vadd.f32 0.0, %v249
    %251 = vdwg.mxu0
    %v253 = vsel %vm45, %v200, 0
    %255 = vmatpush.bf16.xpose.msra.mxu0 0
    %256 = vmatpush.bf16.xpose.msra.mxu0 0
    %257 = vmatpush.bf16.xpose.msra.mxu0 0
    %258 = vmatpush.bf16.xpose.msra.mxu0 0
    %259 = vmatpush.bf16.xpose.msra.mxu0 0
    %260 = vmatpush.bf16.xpose.msra.mxu0 0
    %261 = vmatpush.bf16.xpose.msra.mxu0 0
    %262 = vmatpush.bf16.xpose.msra.mxu0 %v253
    %263 = vmatmul.bf16.gmra.mxu0 %v47
    %v264 = vpop.f32.mrf.mxu0
    %v265 = vadd.f32 0.0, %v264
    %v266 = vpop.f32.mrf.mxu0
    %v267 = vadd.f32 0.0, %v266
    %268 = vdwg.mxu0
    %v269 = vmul.f32 %v62, 0.35355338
    %v270 = vmul.f32 %v64, 0.35355338
    %v271 = vmul.f32 %v79, 0.35355338
    %v272 = vmul.f32 %v81, 0.35355338
    %v273 = vmul.f32 %v96, 0.35355338
    %v274 = vmul.f32 %v98, 0.35355338
    %v275 = vmul.f32 %v113, 0.35355338
    %v276 = vmul.f32 %v115, 0.35355338
    %v277 = vpack.c.bf16 %v269, %v269
    %v278 = vpack.c.bf16 %v270, %v270
    %v279 = vpack.c.bf16 %v271, %v271
    %v280 = vpack.c.bf16 %v272, %v272
    %v281 = vpack.c.bf16 %v273, %v273
    %v282 = vpack.c.bf16 %v274, %v274
    %v283 = vpack.c.bf16 %v275, %v275
    %v284 = vpack.c.bf16 %v276, %v276
    %v285 = vpack.c.bf16 %v138, %v138
    %v286 = vpack.c.bf16 %v140, %v140
    %v287 = vpack.c.bf16 %v155, %v155
    %v288 = vpack.c.bf16 %v157, %v157
    %v289 = vpack.c.bf16 %v172, %v172
    %v290 = vpack.c.bf16 %v174, %v174
    %v291 = vpack.c.bf16 %v189, %v189
    %v292 = vpack.c.bf16 %v191, %v191
    %v293 = vld [vmem:[%s1] sm:$0xff]
    %v294 = vld [vmem:[%s1 + $0x8] sm:$0xff]
    %v297 = vunpack.c.l.b16 %v277
    %v298 = vunpack.c.l.b16 %v278
    %v299 = vpack.c.b16 %v298, %v297
    %v302 = vunpack.c.l.b16 %v285
    %v303 = vunpack.c.l.b16 %v286
    %v304 = vpack.c.b16 %v303, %v302
    %vm305 = vcmask 64512
    %v307 = vsel %vm305, %v299, 0
    %v310 = vsel %vm305, %v304, 0
    %312 = vmatpush.bf16.xpose.msra.mxu0 0
    %313 = vmatpush.bf16.xpose.msra.mxu0 0
    %314 = vmatpush.bf16.xpose.msra.mxu0 0
    %315 = vmatpush.bf16.xpose.msra.mxu0 0
    %316 = vmatpush.bf16.xpose.msra.mxu0 0
    %317 = vmatpush.bf16.xpose.msra.mxu0 0
    %318 = vmatpush.bf16.xpose.msra.mxu0 0
    %319 = vmatpush.bf16.xpose.msra.mxu0 %v310
    %320 = vmatmul.bf16.gmra.mxu0 %v307
    %v321 = vpop.f32.mrf.mxu0
    %v322 = vadd.f32 %v293, %v321
    %v323 = vpop.f32.mrf.mxu0
    %v324 = vadd.f32 %v294, %v323
    %325 = vdwg.mxu0
    %v328 = vunpack.c.l.b16 %v279
    %v329 = vunpack.c.l.b16 %v280
    %v330 = vpack.c.b16 %v329, %v328
    %v333 = vunpack.c.l.b16 %v287
    %v334 = vunpack.c.l.b16 %v288
    %v335 = vpack.c.b16 %v334, %v333
    %v337 = vsel %vm305, %v330, 0
    %v340 = vsel %vm305, %v335, 0
    %342 = vmatpush.bf16.xpose.msra.mxu0 0
    %343 = vmatpush.bf16.xpose.msra.mxu0 0
    %344 = vmatpush.bf16.xpose.msra.mxu0 0
    %345 = vmatpush.bf16.xpose.msra.mxu0 0
    %346 = vmatpush.bf16.xpose.msra.mxu0 0
    %347 = vmatpush.bf16.xpose.msra.mxu0 0
    %348 = vmatpush.bf16.xpose.msra.mxu0 0
    %349 = vmatpush.bf16.xpose.msra.mxu0 %v340
    %350 = vmatmul.bf16.gmra.mxu0 %v337
    %v351 = vpop.f32.mrf.mxu0
    %v352 = vadd.f32 %v293, %v351
    %v353 = vpop.f32.mrf.mxu0
    %v354 = vadd.f32 %v294, %v353
    %355 = vdwg.mxu0
    %v358 = vunpack.c.l.b16 %v281
    %v359 = vunpack.c.l.b16 %v282
    %v360 = vpack.c.b16 %v359, %v358
    %v363 = vunpack.c.l.b16 %v289
    %v364 = vunpack.c.l.b16 %v290
    %v365 = vpack.c.b16 %v364, %v363
    %v367 = vsel %vm305, %v360, 0
    %v370 = vsel %vm305, %v365, 0
    %372 = vmatpush.bf16.xpose.msra.mxu0 0
    %373 = vmatpush.bf16.xpose.msra.mxu0 0
    %374 = vmatpush.bf16.xpose.msra.mxu0 0
    %375 = vmatpush.bf16.xpose.msra.mxu0 0
    %376 = vmatpush.bf16.xpose.msra.mxu0 0
    %377 = vmatpush.bf16.xpose.msra.mxu0 0
    %378 = vmatpush.bf16.xpose.msra.mxu0 0
    %379 = vmatpush.bf16.xpose.msra.mxu0 %v370
    %380 = vmatmul.bf16.gmra.mxu0 %v367
    %v381 = vpop.f32.mrf.mxu0
    %v382 = vadd.f32 %v293, %v381
    %v383 = vpop.f32.mrf.mxu0
    %v384 = vadd.f32 %v294, %v383
    %385 = vdwg.mxu0
    %v388 = vunpack.c.l.b16 %v283
    %v389 = vunpack.c.l.b16 %v284
    %v390 = vpack.c.b16 %v389, %v388
    %v393 = vunpack.c.l.b16 %v291
    %v394 = vunpack.c.l.b16 %v292
    %v395 = vpack.c.b16 %v394, %v393
    %v397 = vsel %vm305, %v390, 0
    %v400 = vsel %vm305, %v395, 0
    %402 = vmatpush.bf16.xpose.msra.mxu0 0
    %403 = vmatpush.bf16.xpose.msra.mxu0 0
    %404 = vmatpush.bf16.xpose.msra.mxu0 0
    %405 = vmatpush.bf16.xpose.msra.mxu0 0
    %406 = vmatpush.bf16.xpose.msra.mxu0 0
    %407 = vmatpush.bf16.xpose.msra.mxu0 0
    %408 = vmatpush.bf16.xpose.msra.mxu0 0
    %409 = vmatpush.bf16.xpose.msra.mxu0 %v400
    %410 = vmatmul.bf16.gmra.mxu0 %v397
    %v411 = vpop.f32.mrf.mxu0
    %v412 = vadd.f32 %v293, %v411
    %v413 = vpop.f32.mrf.mxu0
    %v414 = vadd.f32 %v294, %v413
    %415 = vdwg.mxu0
    %vm416 = vcmask 130048
    %v417 = vsel %vm416, %v322, -inf
    %418 = vmax.xlane.f32.xlu0 %v417
    %v419 = vpop.xlane.xlu0 %418
    %v420 = vsel %vm416, %v324, -inf
    %421 = vmax.xlane.f32.xlu0 %v420
    %v422 = vpop.xlane.xlu0 %421
    %v423 = vsel %vm416, %v352, -inf
    %424 = vmax.xlane.f32.xlu0 %v423
    %v425 = vpop.xlane.xlu0 %424
    %v426 = vsel %vm416, %v354, -inf
    %427 = vmax.xlane.f32.xlu0 %v426
    %v428 = vpop.xlane.xlu0 %427
    %v429 = vsel %vm416, %v382, -inf
    %430 = vmax.xlane.f32.xlu0 %v429
    %v431 = vpop.xlane.xlu0 %430
    %v432 = vsel %vm416, %v384, -inf
    %433 = vmax.xlane.f32.xlu0 %v432
    %v434 = vpop.xlane.xlu0 %433
    %v435 = vsel %vm416, %v412, -inf
    %436 = vmax.xlane.f32.xlu0 %v435
    %v437 = vpop.xlane.xlu0 %436
    %v438 = vsel %vm416, %v414, -inf
    %439 = vmax.xlane.f32.xlu0 %v438
    %v440 = vpop.xlane.xlu0 %439
    %v441 = vsub.f32 %v322, %v419
    %v442 = vsub.f32 %v324, %v422
    %v443 = vsub.f32 %v352, %v425
    %v444 = vsub.f32 %v354, %v428
    %v445 = vsub.f32 %v382, %v431
    %v446 = vsub.f32 %v384, %v434
    %v447 = vsub.f32 %v412, %v437
    %v448 = vsub.f32 %v414, %v440
    %v449 = vmul.f32 %v441, 1.442695
    %v450 = vpow.pop %v449
    %v451 = vmul.f32 %v442, 1.442695
    %v452 = vpow.pop %v451
    %v453 = vmul.f32 %v443, 1.442695
    %v454 = vpow.pop %v453
    %v455 = vmul.f32 %v444, 1.442695
    %v456 = vpow.pop %v455
    %v457 = vmul.f32 %v445, 1.442695
    %v458 = vpow.pop %v457
    %v459 = vmul.f32 %v446, 1.442695
    %v460 = vpow.pop %v459
    %v461 = vmul.f32 %v447, 1.442695
    %v462 = vpow.pop %v461
    %v463 = vmul.f32 %v448, 1.442695
    %v464 = vpow.pop %v463
    %v465 = vsel %vm416, %v450, 0.0
    %466 = vadd.xlane.f32.xlu0 %v465
    %v467 = vpop.xlane.xlu0 %466
    %v468 = vsel %vm416, %v452, 0.0
    %469 = vadd.xlane.f32.xlu0 %v468
    %v470 = vpop.xlane.xlu0 %469
    %v471 = vsel %vm416, %v454, 0.0
    %472 = vadd.xlane.f32.xlu0 %v471
    %v473 = vpop.xlane.xlu0 %472
    %v474 = vsel %vm416, %v456, 0.0
    %475 = vadd.xlane.f32.xlu0 %v474
    %v476 = vpop.xlane.xlu0 %475
    %v477 = vsel %vm416, %v458, 0.0
    %478 = vadd.xlane.f32.xlu0 %v477
    %v479 = vpop.xlane.xlu0 %478
    %v480 = vsel %vm416, %v460, 0.0
    %481 = vadd.xlane.f32.xlu0 %v480
    %v482 = vpop.xlane.xlu0 %481
    %v483 = vsel %vm416, %v462, 0.0
    %484 = vadd.xlane.f32.xlu0 %v483
    %v485 = vpop.xlane.xlu0 %484
    %v486 = vsel %vm416, %v464, 0.0
    %487 = vadd.xlane.f32.xlu0 %v486
    %v488 = vpop.xlane.xlu0 %487
    %v489 = vpack.c.bf16 %v450, %v450
    %v490 = vpack.c.bf16 %v452, %v452
    %v491 = vpack.c.bf16 %v454, %v454
    %v492 = vpack.c.bf16 %v456, %v456
    %v493 = vpack.c.bf16 %v458, %v458
    %v494 = vpack.c.bf16 %v460, %v460
    %v495 = vpack.c.bf16 %v462, %v462
    %v496 = vpack.c.bf16 %v464, %v464
    %v497 = vpack.c.bf16 %v214, %v214
    %v498 = vpack.c.bf16 %v216, %v216
    %v499 = vpack.c.bf16 %v231, %v231
    %v500 = vpack.c.bf16 %v233, %v233
    %v501 = vpack.c.bf16 %v248, %v248
    %v502 = vpack.c.bf16 %v250, %v250
    %v503 = vpack.c.bf16 %v265, %v265
    %v504 = vpack.c.bf16 %v267, %v267
    %v507 = vunpack.c.l.b16 %v489
    %v508 = vunpack.c.l.b16 %v490
    %v509 = vpack.c.b16 %v508, %v507
    %v512 = vunpack.c.l.b16 %v497
    %v513 = vunpack.c.l.b16 %v498
    %v514 = vpack.c.b16 %v513, %v512
    %v517 = vsel %vm416, %v509, 0
    %519 = vmatpush.bf16.msra.mxu0 0
    %520 = vmatpush.bf16.msra.mxu0 0
    %521 = vmatpush.bf16.msra.mxu0 0
    %522 = vmatpush.bf16.msra.mxu0 0
    %523 = vmatpush.bf16.msra.mxu0 0
    %524 = vmatpush.bf16.msra.mxu0 0
    %525 = vmatpush.bf16.msra.mxu0 0
    %526 = vmatpush.bf16.msra.mxu0 %v514
    %527 = vmatmul.bf16.gmra.mxu0 %v517
    %v528 = vpop.f32.mrf.mxu0
    %v529 = vadd.f32 0.0, %v528
    %v530 = vpop.f32.mrf.mxu0
    %v531 = vadd.f32 0.0, %v530
    %532 = vdwg.mxu0
    %v535 = vunpack.c.l.b16 %v491
    %v536 = vunpack.c.l.b16 %v492
    %v537 = vpack.c.b16 %v536, %v535
    %v540 = vunpack.c.l.b16 %v499
    %v541 = vunpack.c.l.b16 %v500
    %v542 = vpack.c.b16 %v541, %v540
    %v545 = vsel %vm416, %v537, 0
    %547 = vmatpush.bf16.msra.mxu0 0
    %548 = vmatpush.bf16.msra.mxu0 0
    %549 = vmatpush.bf16.msra.mxu0 0
    %550 = vmatpush.bf16.msra.mxu0 0
    %551 = vmatpush.bf16.msra.mxu0 0
    %552 = vmatpush.bf16.msra.mxu0 0
    %553 = vmatpush.bf16.msra.mxu0 0
    %554 = vmatpush.bf16.msra.mxu0 %v542
    %555 = vmatmul.bf16.gmra.mxu0 %v545
    %v556 = vpop.f32.mrf.mxu0
    %v557 = vadd.f32 0.0, %v556
    %v558 = vpop.f32.mrf.mxu0
    %v559 = vadd.f32 0.0, %v558
    %560 = vdwg.mxu0
    %v563 = vunpack.c.l.b16 %v493
    %v564 = vunpack.c.l.b16 %v494
    %v565 = vpack.c.b16 %v564, %v563
    %v568 = vunpack.c.l.b16 %v501
    %v569 = vunpack.c.l.b16 %v502
    %v570 = vpack.c.b16 %v569, %v568
    %v573 = vsel %vm416, %v565, 0
    %575 = vmatpush.bf16.msra.mxu0 0
    %576 = vmatpush.bf16.msra.mxu0 0
    %577 = vmatpush.bf16.msra.mxu0 0
    %578 = vmatpush.bf16.msra.mxu0 0
    %579 = vmatpush.bf16.msra.mxu0 0
    %580 = vmatpush.bf16.msra.mxu0 0
    %581 = vmatpush.bf16.msra.mxu0 0
    %582 = vmatpush.bf16.msra.mxu0 %v570
    %583 = vmatmul.bf16.gmra.mxu0 %v573
    %v584 = vpop.f32.mrf.mxu0
    %v585 = vadd.f32 0.0, %v584
    %v586 = vpop.f32.mrf.mxu0
    %v587 = vadd.f32 0.0, %v586
    %588 = vdwg.mxu0
    %v591 = vunpack.c.l.b16 %v495
    %v592 = vunpack.c.l.b16 %v496
    %v593 = vpack.c.b16 %v592, %v591
    %v596 = vunpack.c.l.b16 %v503
    %v597 = vunpack.c.l.b16 %v504
    %v598 = vpack.c.b16 %v597, %v596
    %v601 = vsel %vm416, %v593, 0
    %603 = vmatpush.bf16.msra.mxu0 0
    %604 = vmatpush.bf16.msra.mxu0 0
    %605 = vmatpush.bf16.msra.mxu0 0
    %606 = vmatpush.bf16.msra.mxu0 0
    %607 = vmatpush.bf16.msra.mxu0 0
    %608 = vmatpush.bf16.msra.mxu0 0
    %609 = vmatpush.bf16.msra.mxu0 0
    %610 = vmatpush.bf16.msra.mxu0 %v598
    %611 = vmatmul.bf16.gmra.mxu0 %v601
    %v612 = vpop.f32.mrf.mxu0
    %v613 = vadd.f32 0.0, %v612
    %v614 = vpop.f32.mrf.mxu0
    %v615 = vadd.f32 0.0, %v614
    %616 = vdwg.mxu0
    %v617 = vrcp.pop %v467
    %v618 = vrcp.pop %v470
    %v619 = vrcp.pop %v473
    %v620 = vrcp.pop %v476
    %v621 = vrcp.pop %v479
    %v622 = vrcp.pop %v482
    %v623 = vrcp.pop %v485
    %v624 = vrcp.pop %v488
    %v625 = vmul.f32 %v529, %v617
    %v626 = vmul.f32 %v531, %v618
    %v627 = vmul.f32 %v557, %v619
    %v628 = vmul.f32 %v559, %v620
    %v629 = vmul.f32 %v585, %v621
    %v630 = vmul.f32 %v587, %v622
    %v631 = vmul.f32 %v613, %v623
    %v632 = vmul.f32 %v615, %v624
    %v633 = vpack.c.bf16 %v625, %v625
    %v634 = vpack.c.bf16 %v626, %v626
    %v635 = vpack.c.bf16 %v627, %v627
    %v636 = vpack.c.bf16 %v628, %v628
    %v637 = vpack.c.bf16 %v629, %v629
    %v638 = vpack.c.bf16 %v630, %v630
    %v639 = vpack.c.bf16 %v631, %v631
    %v640 = vpack.c.bf16 %v632, %v632
    %v641 = vld [vmem:[%s5] sm:$0xff]
    %v642 = vld [vmem:[%s5 + $0x8] sm:$0xff]
    %v643 = vld [vmem:[%s5 + $0x10] sm:$0xff]
    %v644 = vld [vmem:[%s5 + $0x18] sm:$0xff]
    %v645 = vld [vmem:[%s5 + $0x20] sm:$0xff]
    %v646 = vld [vmem:[%s5 + $0x28] sm:$0xff]
    %v647 = vld [vmem:[%s5 + $0x30] sm:$0xff]
    %v648 = vld [vmem:[%s5 + $0x38] sm:$0xff]
    %v649 = vld [vmem:[%s5 + $0x40] sm:$0xff]
    %v650 = vld [vmem:[%s5 + $0x48] sm:$0xff]
    %v651 = vld [vmem:[%s5 + $0x50] sm:$0xff]
    %v652 = vld [vmem:[%s5 + $0x58] sm:$0xff]
    %v653 = vld [vmem:[%s5 + $0x60] sm:$0xff]
    %v654 = vld [vmem:[%s5 + $0x68] sm:$0xff]
    %v655 = vld [vmem:[%s5 + $0x70] sm:$0xff]
    %v656 = vld [vmem:[%s5 + $0x78] sm:$0xff]
    %v657 = vpack.c.bf16 %v641, %v641
    %v658 = vpack.c.bf16 %v642, %v642
    %v659 = vpack.c.bf16 %v643, %v643
    %v660 = vpack.c.bf16 %v644, %v644
    %v661 = vpack.c.bf16 %v645, %v645
    %v662 = vpack.c.bf16 %v646, %v646
    %v663 = vpack.c.bf16 %v647, %v647
    %v664 = vpack.c.bf16 %v648, %v648
    %v665 = vpack.c.bf16 %v649, %v649
    %v666 = vpack.c.bf16 %v650, %v650
    %v667 = vpack.c.bf16 %v651, %v651
    %v668 = vpack.c.bf16 %v652, %v652
    %v669 = vpack.c.bf16 %v653, %v653
    %v670 = vpack.c.bf16 %v654, %v654
    %v671 = vpack.c.bf16 %v655, %v655
    %v672 = vpack.c.bf16 %v656, %v656
    %v675 = vunpack.c.l.b16 %v633
    %v676 = vunpack.c.l.b16 %v634
    %v677 = vpack.c.b16 %v676, %v675
    %v682 = vunpack.c.l.b16 %v657
    %v683 = vunpack.c.l.b16 %v658
    %v684 = vunpack.c.l.b16 %v659
    %v685 = vunpack.c.l.b16 %v660
    %v686 = vpack.c.b16 %v683, %v682
    %v687 = vpack.c.b16 %v685, %v684
    %v689 = vsel %vm305, %v677, 0
    %v692 = vsel %vm305, %v686, 0
    %v695 = vsel %vm305, %v687, 0
    %697 = vmatpush.bf16.xpose.msra.mxu0 0
    %698 = vmatpush.bf16.xpose.msra.mxu0 0
    %699 = vmatpush.bf16.xpose.msra.mxu0 0
    %700 = vmatpush.bf16.xpose.msra.mxu0 0
    %701 = vmatpush.bf16.xpose.msra.mxu0 0
    %702 = vmatpush.bf16.xpose.msra.mxu0 0
    %703 = vmatpush.bf16.xpose.msra.mxu0 %v695
    %704 = vmatpush.bf16.xpose.msra.mxu0 %v692
    %705 = vmatmul.bf16.gmra.mxu0 %v689
    %v706 = vpop.f32.mrf.mxu0
    %v707 = vadd.f32 0.0, %v706
    %v708 = vpop.f32.mrf.mxu0
    %v709 = vadd.f32 0.0, %v708
    %710 = vdwg.mxu0
    %v713 = vunpack.c.l.b16 %v635
    %v714 = vunpack.c.l.b16 %v636
    %v715 = vpack.c.b16 %v714, %v713
    %v720 = vunpack.c.l.b16 %v661
    %v721 = vunpack.c.l.b16 %v662
    %v722 = vunpack.c.l.b16 %v663
    %v723 = vunpack.c.l.b16 %v664
    %v724 = vpack.c.b16 %v721, %v720
    %v725 = vpack.c.b16 %v723, %v722
    %v727 = vsel %vm305, %v715, 0
    %v730 = vsel %vm305, %v724, 0
    %v733 = vsel %vm305, %v725, 0
    %735 = vmatpush.bf16.xpose.msra.mxu0 0
    %736 = vmatpush.bf16.xpose.msra.mxu0 0
    %737 = vmatpush.bf16.xpose.msra.mxu0 0
    %738 = vmatpush.bf16.xpose.msra.mxu0 0
    %739 = vmatpush.bf16.xpose.msra.mxu0 0
    %740 = vmatpush.bf16.xpose.msra.mxu0 0
    %741 = vmatpush.bf16.xpose.msra.mxu0 %v733
    %742 = vmatpush.bf16.xpose.msra.mxu0 %v730
    %743 = vmatmul.bf16.gmra.mxu0 %v727
    %v744 = vpop.f32.mrf.mxu0
    %v745 = vadd.f32 0.0, %v744
    %v746 = vpop.f32.mrf.mxu0
    %v747 = vadd.f32 0.0, %v746
    %748 = vdwg.mxu0
    %v751 = vunpack.c.l.b16 %v637
    %v752 = vunpack.c.l.b16 %v638
    %v753 = vpack.c.b16 %v752, %v751
    %v758 = vunpack.c.l.b16 %v665
    %v759 = vunpack.c.l.b16 %v666
    %v760 = vunpack.c.l.b16 %v667
    %v761 = vunpack.c.l.b16 %v668
    %v762 = vpack.c.b16 %v759, %v758
    %v763 = vpack.c.b16 %v761, %v760
    %v765 = vsel %vm305, %v753, 0
    %v768 = vsel %vm305, %v762, 0
    %v771 = vsel %vm305, %v763, 0
    %773 = vmatpush.bf16.xpose.msra.mxu0 0
    %774 = vmatpush.bf16.xpose.msra.mxu0 0
    %775 = vmatpush.bf16.xpose.msra.mxu0 0
    %776 = vmatpush.bf16.xpose.msra.mxu0 0
    %777 = vmatpush.bf16.xpose.msra.mxu0 0
    %778 = vmatpush.bf16.xpose.msra.mxu0 0
    %779 = vmatpush.bf16.xpose.msra.mxu0 %v771
    %780 = vmatpush.bf16.xpose.msra.mxu0 %v768
    %781 = vmatmul.bf16.gmra.mxu0 %v765
    %v782 = vpop.f32.mrf.mxu0
    %v783 = vadd.f32 0.0, %v782
    %v784 = vpop.f32.mrf.mxu0
    %v785 = vadd.f32 0.0, %v784
    %786 = vdwg.mxu0
    %v789 = vunpack.c.l.b16 %v639
    %v790 = vunpack.c.l.b16 %v640
    %v791 = vpack.c.b16 %v790, %v789
    %v796 = vunpack.c.l.b16 %v669
    %v797 = vunpack.c.l.b16 %v670
    %v798 = vunpack.c.l.b16 %v671
    %v799 = vunpack.c.l.b16 %v672
    %v800 = vpack.c.b16 %v797, %v796
    %v801 = vpack.c.b16 %v799, %v798
    %v803 = vsel %vm305, %v791, 0
    %v806 = vsel %vm305, %v800, 0
    %v809 = vsel %vm305, %v801, 0
    %811 = vmatpush.bf16.xpose.msra.mxu0 0
    %812 = vmatpush.bf16.xpose.msra.mxu0 0
    %813 = vmatpush.bf16.xpose.msra.mxu0 0
    %814 = vmatpush.bf16.xpose.msra.mxu0 0
    %815 = vmatpush.bf16.xpose.msra.mxu0 0
    %816 = vmatpush.bf16.xpose.msra.mxu0 0
    %817 = vmatpush.bf16.xpose.msra.mxu0 %v809
    %818 = vmatpush.bf16.xpose.msra.mxu0 %v806
    %819 = vmatmul.bf16.gmra.mxu0 %v803
    %v820 = vpop.f32.mrf.mxu0
    %v821 = vadd.f32 0.0, %v820
    %v822 = vpop.f32.mrf.mxu0
    %v823 = vadd.f32 0.0, %v822
    %824 = vdwg.mxu0
    %v825 = vsel %vm45, %v707, 0.0
    %v826 = vsel %vm45, %v745, 0.0
    %v827 = vadd.f32 %v825, %v826
    %v828 = vsel %vm45, %v783, 0.0
    %v829 = vadd.f32 %v827, %v828
    %v830 = vsel %vm45, %v821, 0.0
    %v831 = vadd.f32 %v829, %v830
    %v832 = vsel %vm45, %v709, 0.0
    %v833 = vsel %vm45, %v747, 0.0
    %v834 = vadd.f32 %v832, %v833
    %v835 = vsel %vm45, %v785, 0.0
    %v836 = vadd.f32 %v834, %v835
    %v837 = vsel %vm45, %v823, 0.0
    %v838 = vadd.f32 %v836, %v837
    %v839 = vld [vmem:[%s6] sm:$0x1]
    %v841 = vperm.slane %v839, 0
    %v843 = vadd.f32 %v831, %v841
    %v844 = vadd.f32 %v838, %v841
    %845 = vst.msk [vmem:[#allocation2] sm:$0xff] %vm45, %v843
    %846 = vst.msk [vmem:[#allocation2 + $0x8] sm:$0xff] %vm45, %v844
    // Predicated region
    $region30: #{attention_pallas.1} parent=1 // pred_check
      _
    $region31: #{attention_pallas.1} parent=1 // pred_check_branch
      %848 = sbr.rel (0) target = $region33
    $region32: #{attention_pallas.1} parent=1 // pred_region
      %850 = vsyncadd [#allocation3], 0
      %s851 = sshll.u32 [#allocation2], 4
      %s852 = int_to_ptr.vmem [resolvable:$true] %s851
      %s853 = sshll.u32 %s7, 4
      %s854 = int_to_ptr.hbm [resolvable:$true] %s853
      %859 = dma.vmem_to_hbm [thread:$0]  %s852, 256, %s854, [#allocation3], 128, 128, 8
    $region33: #{attention_pallas.1} parent=1 // pred_fallthru
      _
    // Predicated region
    $region34: #{attention_pallas.1} parent=1 // pred_check
      _
    $region35: #{attention_pallas.1} parent=1 // pred_check_branch
      %861 = sbr.rel (0) target = $region37
    $region36: #{attention_pallas.1} parent=1 // pred_region
      %863 = dma.done [#allocation3], 256
    $region37: #{attention_pallas.1} parent=1 // pred_fallthru
      _
    %864 = vsyncpa [#allocation3], 1

</llo_original>
